<compile_context>
chip_gen: v6e
topology: v6e:2x2x1
jax: 0.10.0
libtpu: 0.0.40
codegen_flags: <defaults>
</compile_context>

<pallas_src>
import functools
import math

import jax
import jax.numpy as jnp
from jax.experimental import pallas as pl
from jax.experimental.pallas import tpu as pltpu


# ----------------------------- shared helpers -----------------------------

_VMEM_LIMIT = 32 * 1024 * 1024
_EPS = 1e-5


def _cparams(n_axes=1):
    return pltpu.CompilerParams(
        dimension_semantics=("parallel",) * n_axes,
        vmem_limit_bytes=_VMEM_LIMIT)


_BUFFERED_OK = None


def _weight_pipeline_mode():
    """Probe once whether pipeline_mode=pl.Buffered(1) is supported."""
    global _BUFFERED_OK
    if _BUFFERED_OK is None:
        try:
            def _probe(x_ref, o_ref):
                o_ref[...] = x_ref[...]
            fn = pl.pallas_call(
                _probe,
                grid=(1,),
                in_specs=[pl.BlockSpec((8, 128), lambda i: (0, 0),
                                       pipeline_mode=pl.Buffered(1))],
                out_specs=pl.BlockSpec((8, 128), lambda i: (0, 0)),
                out_shape=jax.ShapeDtypeStruct((8, 128), jnp.float32))
            jax.block_until_ready(fn(jnp.zeros((8, 128), jnp.float32)))
            _BUFFERED_OK = True
        except Exception:
            _BUFFERED_OK = False
    return pl.Buffered(1) if _BUFFERED_OK else None


def _wspec(shape):
    """BlockSpec for grid-invariant (weight / bias / LN) operands."""
    nd = len(shape)
    pm = _weight_pipeline_mode()
    kwargs = {} if pm is None else {"pipeline_mode": pm}
    return pl.BlockSpec(shape, lambda i, _nd=nd: (0,) * _nd, **kwargs)


# ----------------------------- generic linear kernels -----------------------------

def _linear_kernel(x_ref, w_ref, o_ref):
    o_ref[...] = jnp.dot(x_ref[...], w_ref[...],
                         preferred_element_type=jnp.float32).astype(o_ref.dtype)


def _linear_bias_kernel(x_ref, w_ref, b_ref, o_ref):
    acc = jnp.dot(x_ref[...], w_ref[...],
                  preferred_element_type=jnp.float32) + b_ref[...]
    o_ref[...] = acc.astype(o_ref.dtype)


def pallas_linear(x, w, b=None, out_dtype=jnp.bfloat16, tm=256):
    """y = x @ w (+ b).  x: (M, K) bf16, w: (K, N) bf16.  Gridded over M rows."""
    M, K = x.shape
    N = w.shape[1]
    tm = min(tm, M)
    grid = (pl.cdiv(M, tm),)
    in_specs = [pl.BlockSpec((tm, K), lambda i: (i, 0)), _wspec((K, N))]
    args = (x, w)
    kernel = _linear_kernel
    if b is not None:
        in_specs = in_specs + [_wspec((1, N))]
        args = args + (b,)
        kernel = _linear_bias_kernel
    return pl.pallas_call(
        kernel,
        grid=grid,
        in_specs=in_specs,
        out_specs=pl.BlockSpec((tm, N), lambda i: (i, 0)),
        out_shape=jax.ShapeDtypeStruct((M, N), out_dtype),
        compiler_params=_cparams(1),
    )(*args)


# ----------------------------- attention core (heads batched) -----------------------------

def _attention_kernel(q_ref, k_ref, v_ref, pad_ref, o_ref, *, causal, scale):
    q = q_ref[0]          # (H, Lq, dk) bf16
    k = k_ref[0]          # (H, Lk, dk) bf16
    v = v_ref[0]          # (H, Lk, dk) bf16
    H, Lq, dk = q.shape
    Lk = k.shape[1]

    # scores for all heads at once: (H, Lq, Lk), f32 accumulation
    s = jax.lax.dot_general(q, k, (((2,), (2,)), ((0,), (0,))),
                            preferred_element_type=jnp.float32) * scale

    # mask built in-kernel (1.0 = disallowed key position)
    mask = jnp.broadcast_to(pad_ref[0], (Lq, Lk))
    if causal:
        row = jax.lax.broadcasted_iota(jnp.int32, (Lq, Lk), 0)
        col = jax.lax.broadcasted_iota(jnp.int32, (Lq, Lk), 1)
        mask = jnp.maximum(mask, (col > row).astype(jnp.float32))
    keep = (1.0 - mask)[None, :, :]

    s = s - jnp.max(s, axis=-1, keepdims=True)
    e = jnp.exp(s) * keep                               # masked_fill(-inf) semantics
    denom = jnp.maximum(jnp.sum(e, axis=-1, keepdims=True), 1e-30)
    a = e * pl.reciprocal(denom, approx=True)

    ctx = jax.lax.dot_general(a.astype(jnp.bfloat16), v,
                              (((2,), (1,)), ((0,), (0,))),
                              preferred_element_type=jnp.float32)   # (H, Lq, dk)
    o_ref[0] = ctx.astype(o_ref.dtype)


def pallas_attention(q, k, v, kv_pad, causal, scale):
    """q/k/v: (B, H, L, dk) bf16 head-major; kv_pad: (B, Lk) float (1 = padded)."""
    B, H, Lq, dk = q.shape
    Lk = k.shape[2]
    pad3 = kv_pad.reshape(B, 1, Lk).astype(jnp.float32)
    return pl.pallas_call(
        functools.partial(_attention_kernel, causal=causal, scale=scale),
        grid=(B,),
        in_specs=[pl.BlockSpec((1, H, Lq, dk), lambda b: (b, 0, 0, 0)),
                  pl.BlockSpec((1, H, Lk, dk), lambda b: (b, 0, 0, 0)),
                  pl.BlockSpec((1, H, Lk, dk), lambda b: (b, 0, 0, 0)),
                  pl.BlockSpec((1, 1, Lk), lambda b: (b, 0, 0))],
        out_specs=pl.BlockSpec((1, H, Lq, dk), lambda b: (b, 0, 0, 0)),
        out_shape=jax.ShapeDtypeStruct((B, H, Lq, dk), jnp.bfloat16),
        compiler_params=_cparams(1),
    )(q, k, v, pad3)


# ----------------------------- fused output-proj + residual + LN -----------------------------

def _oproj_res_ln_kernel(ctx_ref, x_ref, wo_ref, bo_ref, g_ref, b_ref, o_ref, *, eps):
    y = jnp.dot(ctx_ref[...], wo_ref[...],
                preferred_element_type=jnp.float32) + bo_ref[...]
    z = x_ref[...].astype(jnp.float32) + y
    mu = jnp.mean(z, axis=-1, keepdims=True)
    var = jnp.mean((z - mu) ** 2, axis=-1, keepdims=True)
    zn = (z - mu) * jax.lax.rsqrt(var + eps)
    o_ref[...] = (zn * g_ref[...] + b_ref[...]).astype(o_ref.dtype)


def pallas_oproj_res_ln(ctx2d, x2d, wo, bo, gamma, beta, tm=256):
    M, D = ctx2d.shape
    tm = min(tm, M)
    return pl.pallas_call(
        functools.partial(_oproj_res_ln_kernel, eps=_EPS),
        grid=(pl.cdiv(M, tm),),
        in_specs=[pl.BlockSpec((tm, D), lambda i: (i, 0)),
                  pl.BlockSpec((tm, D), lambda i: (i, 0)),
                  _wspec((D, D)), _wspec((1, D)), _wspec((1, D)), _wspec((1, D))],
        out_specs=pl.BlockSpec((tm, D), lambda i: (i, 0)),
        out_shape=jax.ShapeDtypeStruct((M, D), jnp.bfloat16),
        compiler_params=_cparams(1),
    )(ctx2d, x2d, wo, bo, gamma, beta)


# ----------------------------- fused FFN + residual + LN -----------------------------

def _ffn_res_ln_kernel(x_ref, w1_ref, b1_ref, w2_ref, b2_ref, g_ref, b_ref, o_ref, *, eps):
    x = x_ref[...]                                        # bf16
    h = jnp.dot(x, w1_ref[...], preferred_element_type=jnp.float32) + b1_ref[...]
    h = jnp.maximum(h, 0.0)
    y = jnp.dot(h.astype(jnp.bfloat16), w2_ref[...],
                preferred_element_type=jnp.float32) + b2_ref[...]
    z = x.astype(jnp.float32) + y
    mu = jnp.mean(z, axis=-1, keepdims=True)
    var = jnp.mean((z - mu) ** 2, axis=-1, keepdims=True)
    zn = (z - mu) * jax.lax.rsqrt(var + eps)
    o_ref[...] = (zn * g_ref[...] + b_ref[...]).astype(o_ref.dtype)


def pallas_ffn_res_ln(p, x2d, gamma, beta, tm=256):
    M, D = x2d.shape
    d_ff = p["w1"].shape[1]
    tm = min(tm, M)
    return pl.pallas_call(
        functools.partial(_ffn_res_ln_kernel, eps=_EPS),
        grid=(pl.cdiv(M, tm),),
        in_specs=[pl.BlockSpec((tm, D), lambda i: (i, 0)),
                  _wspec((D, d_ff)), _wspec((1, d_ff)),
                  _wspec((d_ff, D)), _wspec((1, D)),
                  _wspec((1, D)), _wspec((1, D))],
        out_specs=pl.BlockSpec((tm, D), lambda i: (i, 0)),
        out_shape=jax.ShapeDtypeStruct((M, D), jnp.bfloat16),
        compiler_params=_cparams(1),
    )(x2d, p["w1"], p["b1"], p["w2"], p["b2"], gamma, beta)


# ----------------------------- MHA block (projections + attention + o-proj) -----------------------------

def mha_block(p, xq2d, xkv2d, B, Lq, Lk, kv_pad, gamma, beta, n_heads, causal):
    """xq2d: (B*Lq, D) bf16; xkv2d: (B*Lk, D) bf16 or None (self-attention)."""
    D = gamma.shape[-1]
    dk = D // n_heads
    scale = 1.0 / math.sqrt(dk)

    if xkv2d is None:
        # self-attention: single fused Q|K|V projection (full-K matmul)
        qkv = pallas_linear(xq2d, p["Wqkv"])                          # (B*Lq, 3D)
        qkv5 = qkv.reshape(B, Lq, 3, n_heads, dk).transpose(2, 0, 3, 1, 4)
        q4, k4, v4 = qkv5[0], qkv5[1], qkv5[2]
    else:
        q = pallas_linear(xq2d, p["Wqkv"][:, :D])                     # (B*Lq, D)
        kv = pallas_linear(xkv2d, p["Wqkv"][:, D:])                   # (B*Lk, 2D)
        q4 = q.reshape(B, Lq, n_heads, dk).transpose(0, 2, 1, 3)
        kv5 = kv.reshape(B, Lk, 2, n_heads, dk).transpose(2, 0, 3, 1, 4)
        k4, v4 = kv5[0], kv5[1]

    ctx = pallas_attention(q4, k4, v4, kv_pad, causal, scale)         # (B,H,Lq,dk)
    ctx2d = ctx.transpose(0, 2, 1, 3).reshape(B * Lq, D)              # head concat
    return pallas_oproj_res_ln(ctx2d, xq2d, p["Wo"], p["bo"], gamma, beta)


# ----------------------------- model glue (JAX) -----------------------------

def positional_encoding(maxlen, d_model):
    pos = jnp.arange(maxlen, dtype=jnp.float32)[:, None]
    i = jnp.arange(d_model)[None, :]
    angle = pos / jnp.power(10000.0, (2.0 * (i // 2)).astype(jnp.float32) / d_model)
    return jnp.where(i % 2 == 0, jnp.sin(angle), jnp.cos(angle)).astype(jnp.float32)


def encoder_layer(p, x2d, B, L, src_pad, n_heads):
    x1 = mha_block(p["attn"], x2d, None, B, L, L, src_pad,
                   p["ln1_g"], p["ln1_b"], n_heads, causal=False)
    return pallas_ffn_res_ln(p["ff"], x1, p["ln2_g"], p["ln2_b"])


def decoder_layer(p, x2d, hs2d, B, Lt, Ls, tgt_pad, src_pad, n_heads):
    x1 = mha_block(p["self_attn"], x2d, None, B, Lt, Lt, tgt_pad,
                   p["ln1_g"], p["ln1_b"], n_heads, causal=True)
    x2 = mha_block(p["src_attn"], x1, hs2d, B, Lt, Ls, src_pad,
                   p["ln2_g"], p["ln2_b"], n_heads, causal=False)
    return pallas_ffn_res_ln(p["ff"], x2, p["ln3_g"], p["ln3_b"])


def transformer_forward(params, source, target, n_heads):
    B, Ls = source.shape
    D = params["encoder"]["emb"].shape[1]
    src_pad = (source == 0).astype(jnp.float32)                      # sequence_mask(source)

    # embeddings + positional encoding stay in XLA (gather); cast to bf16 activations
    xe = (jnp.take(params["encoder"]["emb"], source, axis=0)
          + params["encoder"]["pe"][:Ls][None]).astype(jnp.bfloat16)
    hs2d = xe.reshape(B * Ls, D)
    for lp in params["encoder"]["layers"]:
        hs2d = encoder_layer(lp, hs2d, B, Ls, src_pad, n_heads)

    tgt_in = target[:, :-1]
    Lt = tgt_in.shape[1]
    tgt_pad = (tgt_in == 0).astype(jnp.float32)                      # causal part added in-kernel
    xd = (jnp.take(params["decoder"]["emb"], tgt_in, axis=0)
          + params["decoder"]["pe"][:Lt][None]).astype(jnp.bfloat16)
    y2d = xd.reshape(B * Lt, D)
    for lp in params["decoder"]["layers"]:
        y2d = decoder_layer(lp, y2d, hs2d, B, Lt, Ls, tgt_pad, src_pad, n_heads)

    # lane-dense vocab projection (N padded to 128); slice back in JAX
    logits = pallas_linear(y2d, params["out_w"], params["out_b"], out_dtype=jnp.float32)
    logits = logits[:, :params["depth_target"]]
    return logits.reshape(B, Lt, params["depth_target"])


# ----------------------------- deterministic init -----------------------------

def xavier_normal(key, shape):
    std = math.sqrt(2.0 / (shape[0] + shape[1]))
    return std * jax.random.normal(key, shape, jnp.float32)


def init_mha(key, d_model):
    ks = jax.random.split(key, 4)
    wq = xavier_normal(ks[0], (d_model, d_model))
    wk = xavier_normal(ks[1], (d_model, d_model))
    wv = xavier_normal(ks[2], (d_model, d_model))
    return dict(
        Wqkv=jnp.concatenate([wq, wk, wv], axis=1).astype(jnp.bfloat16),
        Wo=xavier_normal(ks[3], (d_model, d_model)).astype(jnp.bfloat16),
        bo=jnp.zeros((1, d_model), jnp.float32),
    )


def init_ffn(key, d_model, d_ff):
    k1, k2 = jax.random.split(key)
    return dict(
        w1=xavier_normal(k1, (d_model, d_ff)).astype(jnp.bfloat16),
        b1=jnp.zeros((1, d_ff), jnp.float32),
        w2=xavier_normal(k2, (d_ff, d_model)).astype(jnp.bfloat16),
        b2=jnp.zeros((1, d_model), jnp.float32),
    )


def init_enc_layer(key, d_model, d_ff):
    k1, k2 = jax.random.split(key)
    return dict(
        attn=init_mha(k1, d_model), ff=init_ffn(k2, d_model, d_ff),
        ln1_g=jnp.ones((1, d_model), jnp.float32), ln1_b=jnp.zeros((1, d_model), jnp.float32),
        ln2_g=jnp.ones((1, d_model), jnp.float32), ln2_b=jnp.zeros((1, d_model), jnp.float32),
    )


def init_dec_layer(key, d_model, d_ff):
    k1, k2, k3 = jax.random.split(key, 3)
    return dict(
        self_attn=init_mha(k1, d_model), src_attn=init_mha(k2, d_model),
        ff=init_ffn(k3, d_model, d_ff),
        ln1_g=jnp.ones((1, d_model), jnp.float32), ln1_b=jnp.zeros((1, d_model), jnp.float32),
        ln2_g=jnp.ones((1, d_model), jnp.float32), ln2_b=jnp.zeros((1, d_model), jnp.float32),
        ln3_g=jnp.ones((1, d_model), jnp.float32), ln3_b=jnp.zeros((1, d_model), jnp.float32),
    )


def init_params(key, depth_source, depth_target, N, d_model, d_ff, maxlen):
    ks = jax.random.split(key, 2 * N + 4)
    pe = positional_encoding(maxlen, d_model)
    enc_emb = jax.random.normal(ks[0], (depth_source, d_model), jnp.float32).at[0].set(0.0)
    dec_emb = jax.random.normal(ks[1], (depth_target, d_model), jnp.float32).at[0].set(0.0)

    # pad the output projection to a lane-dense width (multiple of 128), ship bf16
    n_pad = ((depth_target + 127) // 128) * 128
    out_w = xavier_normal(ks[2 + 2 * N], (d_model, depth_target))
    out_w_pad = jnp.zeros((d_model, n_pad), jnp.float32).at[:, :depth_target].set(out_w)
    out_b_pad = jnp.zeros((1, n_pad), jnp.float32)

    return dict(
        encoder=dict(emb=enc_emb, pe=pe,
                     layers=[init_enc_layer(ks[2 + i], d_model, d_ff) for i in range(N)]),
        decoder=dict(emb=dec_emb, pe=pe,
                     layers=[init_dec_layer(ks[2 + N + i], d_model, d_ff) for i in range(N)]),
        out_w=out_w_pad.astype(jnp.bfloat16), out_b=out_b_pad,
        depth_target=depth_target,
    )


# ----------------------------- main -----------------------------

if __name__ == "__main__":
    # TODO(synk): the autoregressive greedy-decode branch (target=None) of the
    #             PyTorch module is not implemented; training-path forward only.
    B, Ls, Lt = 2, 8, 8
    d_model, n_heads, d_ff, N = 32, 4, 64, 2
    depth_source, depth_target, maxlen = 11, 13, 16

    key = jax.random.PRNGKey(0)
    kp, ks, kt = jax.random.split(key, 3)

    params = init_params(kp, depth_source, depth_target, N, d_model, d_ff, maxlen)

    source = jax.random.randint(ks, (B, Ls), 1, depth_source, dtype=jnp.int32)
    source = source.at[:, -2:].set(0)                       # some padding tokens
    target = jax.random.randint(kt, (B, Lt), 1, depth_target, dtype=jnp.int32)
    target = target.at[:, 0].set(1)                         # BOS-like token

    out = transformer_forward(params, source, target, n_heads)
    out = jax.block_until_ready(out)

    assert out.shape == (B, Lt - 1, depth_target), out.shape
    assert bool(jnp.all(jnp.isfinite(out)))
    print("KERNEL_OK")
</pallas_src>

<mosaic_0001>
module attributes {stable_mosaic.version = 11 : i64} {
  func.func @_probe(%arg0: i32, %arg1: memref<8x128xf32, #tpu.memory_space<vmem>>, %arg2: memref<8x128xf32, #tpu.memory_space<vmem>>) attributes {dimension_semantics = [#tpu.dimension_semantics<arbitrary>], iteration_bounds = array<i64: 1>, scalar_prefetch = 0 : i64, scratch_operands = 0 : i64, tpu.core_type = #tpu.core_type<tc>, window_params = [{pipeline_mode = #tpu.pipeline_mode<synchronous>, transform_indices = @transform_0, window_bounds = array<i64: 8, 128>}, {pipeline_mode = #tpu.pipeline_mode<synchronous>, transform_indices = @transform_1, window_bounds = array<i64: 8, 128>}]} {
    %c0 = arith.constant 0 : index
    %c0_0 = arith.constant 0 : index
    %0 = vector.load %arg1[%c0, %c0_0] : memref<8x128xf32, #tpu.memory_space<vmem>>, vector<8x128xf32>
    %c0_1 = arith.constant 0 : index
    %c0_2 = arith.constant 0 : index
    %1 = vector.load %arg2[%c0_1, %c0_2] : memref<8x128xf32, #tpu.memory_space<vmem>>, vector<8x128xf32>
    tpu.vector_store %arg2[%c0_1, %c0_2], %0 {strides = array<i32>} : memref<8x128xf32, #tpu.memory_space<vmem>>, vector<8x128xf32>,
    return
  }
  func.func @transform_0(%arg0: i32) -> (i32, i32) {
    %c0_i32 = arith.constant 0 : i32
    %c0_i32_0 = arith.constant 0 : i32
    %c0_i32_1 = arith.constant 0 : i32
    return %c0_i32, %c0_i32_0 : i32, i32
  }
  func.func @transform_1(%arg0: i32) -> (i32, i32) {
    %c0_i32 = arith.constant 0 : i32
    %c0_i32_0 = arith.constant 0 : i32
    %c0_i32_1 = arith.constant 0 : i32
    return %c0_i32, %c0_i32_0 : i32, i32
  }
}

module attributes {stable_mosaic.version = 11 : i64} {
  func.func @_linear_kernel(%arg0: i32, %arg1: memref<16x32xbf16, #tpu.memory_space<vmem>>, %arg2: memref<32x96xbf16, #tpu.memory_space<vmem>>, %arg3: memref<16x96xbf16, #tpu.memory_space<vmem>>) attributes {dimension_semantics = [#tpu.dimension_semantics<parallel>], iteration_bounds = array<i64: 1>, scalar_prefetch = 0 : i64, scratch_operands = 0 : i64, tpu.core_type = #tpu.core_type<tc>, window_params = [{transform_indices = @transform_0, window_bounds = array<i64: 16, 32>}, {pipeline_mode = #tpu.pipeline_mode<synchronous>, transform_indices = @transform_1, window_bounds = array<i64: 32, 96>}, {transform_indices = @transform_2, window_bounds = array<i64: 16, 96>}]} {
    %c0 = arith.constant 0 : index
    %c0_0 = arith.constant 0 : index
    %0 = vector.load %arg1[%c0, %c0_0] : memref<16x32xbf16, #tpu.memory_space<vmem>>, vector<16x32xbf16>
    %c0_1 = arith.constant 0 : index
    %c0_2 = arith.constant 0 : index
    %1 = vector.load %arg2[%c0_1, %c0_2] : memref<32x96xbf16, #tpu.memory_space<vmem>>, vector<32x96xbf16>
    %cst = arith.constant dense<0.000000e+00> : vector<16x96xf32>
    %2 = tpu.matmul %0, %1, %cst {dimension_numbers = #tpu.dot_dimension_numbers<[1], [0], [0], [1], [0, 0, 1, 1], [], []>} : vector<16x32xbf16>, vector<32x96xbf16>, vector<16x96xf32> -> vector<16x96xf32>
    %3 = arith.truncf %2 : vector<16x96xf32> to vector<16x96xbf16>
    %c0_3 = arith.constant 0 : index
    %c0_4 = arith.constant 0 : index
    %4 = vector.load %arg3[%c0_3, %c0_4] : memref<16x96xbf16, #tpu.memory_space<vmem>>, vector<16x96xbf16>
    tpu.vector_store %arg3[%c0_3, %c0_4], %3 {strides = array<i32>} : memref<16x96xbf16, #tpu.memory_space<vmem>>, vector<16x96xbf16>,
    return
  }
  func.func @transform_0(%arg0: i32) -> (i32, i32) {
    %c0_i32 = arith.constant 0 : i32
    %c0_i32_0 = arith.constant 0 : i32
    return %arg0, %c0_i32 : i32, i32
  }
  func.func @transform_1(%arg0: i32) -> (i32, i32) {
    %c0_i32 = arith.constant 0 : i32
    %c0_i32_0 = arith.constant 0 : i32
    %c0_i32_1 = arith.constant 0 : i32
    return %c0_i32, %c0_i32_0 : i32, i32
  }
  func.func @transform_2(%arg0: i32) -> (i32, i32) {
    %c0_i32 = arith.constant 0 : i32
    %c0_i32_0 = arith.constant 0 : i32
    return %arg0, %c0_i32 : i32, i32
  }
}

</mosaic_0001>

<llo_original>
// kernel: tpu_custom_call.1
$region0: #{tpu_custom_call.1}
  #allocation0 [shape = 'u32[]', space=smem, size = 0x4, offset = 0x4, fixed_abs, tag = 'smem constant byte address 0x4 - core index']
  #allocation1 [shape = 'u32[144,128]{1,0:T(1,128)}', space=vmem, size = 0x12000, scoped, tag = 'internal scratch']
  %s0 = inlined_call_operand.hbm [shape: f32[8,128], index: 0, kind: input, shape index: {}]
  %s1 = inlined_call_operand.hbm [shape: f32[8,128], index: 1, kind: output, shape index: {}]
  %s2 = sld [smem:[#allocation0]]
  $region18: #{tpu_custom_call.1} parent=0
    _
  %s4 = ssub.s32 1, %s2
  %s5 = scalar_select 0, %s4, %s2
  $region1: #{tpu_custom_call.1} parent=0
    #allocation2 [shape = 'u8[4096]{0}', space=vmem, size = 0x1000, scoped, tag = 'input window, operand 0, single buffered']
    #allocation3 [shape = 's32[1]{0}', space=sflag, size = 0x4, scoped, tag = 'scoped memory for tpu_custom_call.1']
    #allocation4 [shape = 's32[1]{0}', space=sflag, size = 0x4, scoped, tag = 'scoped memory for tpu_custom_call.1']
    #allocation5 [shape = 'u8[4096]{0}', space=vmem, size = 0x1000, scoped, tag = 'output window, operand 0, single buffered']
    %6 = vsyncpa [#allocation3], 0
    %7 = vsyncpa [#allocation4], 0
    // Predicated region
    $region2: #{tpu_custom_call.1} parent=1 // pred_check
      _
    $region3: #{tpu_custom_call.1} parent=1 // pred_check_branch
      %9 = sbr.rel (0) target = $region5
    $region4: #{tpu_custom_call.1} parent=1 // pred_region
      %s11 = ssub.s32 128, 128
      %12 = vsyncadd [#allocation3], %s11
      %s14 = sshll.u32 [#allocation2], 4
      %s15 = int_to_ptr.vmem [resolvable:$true] %s14
      %17 = dma.hbm_to_vmem [thread:$0]  %s0, 128, %s15, [#allocation3]
    $region5: #{tpu_custom_call.1} parent=1 // pred_fallthru
      _
    // Predicated region
    $region6: #{tpu_custom_call.1} parent=1 // pred_check
      _
    $region7: #{tpu_custom_call.1} parent=1 // pred_check_branch
      %19 = sbr.rel (0) target = $region9
    $region8: #{tpu_custom_call.1} parent=1 // pred_region
      %20 = dma.done [#allocation3], 128
    $region9: #{tpu_custom_call.1} parent=1 // pred_fallthru
      _
    %v21 = vld [vmem:[#allocation2] sm:$0xff]
    %22 = vst [vmem:[#allocation5] sm:$0xff] %v21
    // Predicated region
    $region10: #{tpu_custom_call.1} parent=1 // pred_check
      _
    $region11: #{tpu_custom_call.1} parent=1 // pred_check_branch
      %24 = sbr.rel (0) target = $region13
    $region12: #{tpu_custom_call.1} parent=1 // pred_region
      %s26 = ssub.s32 128, 128
      %27 = vsyncadd [#allocation4], %s26
      %s29 = sshll.u32 [#allocation5], 4
      %s30 = int_to_ptr.vmem [resolvable:$true] %s29
      %32 = dma.vmem_to_hbm [thread:$0]  %s30, 128, %s1, [#allocation4]
    $region13: #{tpu_custom_call.1} parent=1 // pred_fallthru
      _
    // Predicated region
    $region14: #{tpu_custom_call.1} parent=1 // pred_check
      _
    $region15: #{tpu_custom_call.1} parent=1 // pred_check_branch
      %34 = sbr.rel (0) target = $region17
    $region16: #{tpu_custom_call.1} parent=1 // pred_region
      %35 = dma.done [#allocation4], 128
    $region17: #{tpu_custom_call.1} parent=1 // pred_fallthru
      _
    %36 = vsyncpa [#allocation3], 1
    %37 = vsyncpa [#allocation4], 1

// kernel: tpu_custom_call.1
$region0: #{tpu_custom_call.1}
  #allocation0 [shape = 'u32[]', space=smem, size = 0x4, offset = 0x4, fixed_abs, tag = 'smem constant byte address 0x4 - core index']
  #allocation1 [shape = 'u32[144,128]{1,0:T(1,128)}', space=vmem, size = 0x12000, scoped, tag = 'internal scratch']
  %s0 = inlined_call_operand.hbm [shape: bf16[16,32], index: 0, kind: input, shape index: {}]
  %s1 = inlined_call_operand.hbm [shape: bf16[32,96], index: 1, kind: input, shape index: {}]
  %s2 = inlined_call_operand.hbm [shape: bf16[16,96], index: 2, kind: output, shape index: {}]
  %s3 = sld [smem:[#allocation0]]
  $region26: #{tpu_custom_call.1} parent=0
    _
  %s5 = ssub.s32 1, %s3
  %s6 = scalar_select 0, %s5, %s3
  $region1: #{tpu_custom_call.1} parent=0
    #allocation2 [shape = 'u8[4096]{0}', space=vmem, size = 0x1000, scoped, tag = 'input window, operand 0, single buffered']
    #allocation3 [shape = 's32[1]{0}', space=sflag, size = 0x4, scoped, tag = 'scoped memory for tpu_custom_call.1']
    #allocation4 [shape = 's32[1]{0}', space=sflag, size = 0x4, scoped, tag = 'scoped memory for tpu_custom_call.1']
    #allocation5 [shape = 'u8[8192]{0}', space=vmem, size = 0x2000, scoped, tag = 'input window, operand 1, single buffered']
    #allocation6 [shape = 's32[1]{0}', space=sflag, size = 0x4, scoped, tag = 'scoped memory for tpu_custom_call.1']
    #allocation7 [shape = 'u8[4096]{0}', space=vmem, size = 0x1000, scoped, tag = 'output window, operand 0, single buffered']
    %7 = vsyncpa [#allocation3], 0
    %8 = vsyncpa [#allocation6], 0
    %9 = vsyncpa [#allocation4], 0
    // Predicated region
    $region2: #{tpu_custom_call.1} parent=1 // pred_check
      _
    $region3: #{tpu_custom_call.1} parent=1 // pred_check_branch
      %11 = sbr.rel (0) target = $region5
    $region4: #{tpu_custom_call.1} parent=1 // pred_region
      %s13 = ssub.s32 128, 128
      %14 = vsyncadd [#allocation3], %s13
      %s15 = sshll.u32 [#allocation2], 4
      %s16 = int_to_ptr.vmem [resolvable:$true] %s15
      %21 = dma.hbm_to_vmem [thread:$0]  %s0, 128, %s16, [#allocation3], 64, 64, 4
    $region5: #{tpu_custom_call.1} parent=1 // pred_fallthru
      _
    // Predicated region
    $region6: #{tpu_custom_call.1} parent=1 // pred_check
      _
    $region7: #{tpu_custom_call.1} parent=1 // pred_check_branch
      %23 = sbr.rel (0) target = $region9
    $region8: #{tpu_custom_call.1} parent=1 // pred_region
      %s25 = ssub.s32 256, 256
      %26 = vsyncadd [#allocation6], %s25
      %s27 = sshll.u32 [#allocation5], 4
      %s28 = int_to_ptr.vmem [resolvable:$true] %s27
      %33 = dma.hbm_to_vmem [thread:$0]  %s1, 256, %s28, [#allocation6], 64, 64, 4
    $region9: #{tpu_custom_call.1} parent=1 // pred_fallthru
      _
    // Predicated region
    $region10: #{tpu_custom_call.1} parent=1 // pred_check
      _
    $region11: #{tpu_custom_call.1} parent=1 // pred_check_branch
      %35 = sbr.rel (0) target = $region13
    $region12: #{tpu_custom_call.1} parent=1 // pred_region
      %36 = dma.done [#allocation3], 128
    $region13: #{tpu_custom_call.1} parent=1 // pred_fallthru
      _
    // Predicated region
    $region14: #{tpu_custom_call.1} parent=1 // pred_check
      _
    $region15: #{tpu_custom_call.1} parent=1 // pred_check_branch
      %38 = sbr.rel (0) target = $region17
    $region16: #{tpu_custom_call.1} parent=1 // pred_region
      %39 = dma.done [#allocation6], 256
    $region17: #{tpu_custom_call.1} parent=1 // pred_fallthru
      _
    %v41 = vld [vmem:[#allocation2] sm:$0xf]
    %v42 = vld [vmem:[#allocation2 + $0x4] sm:$0xf]
    %v43 = vld [vmem:[#allocation5] sm:$0xf]
    %v44 = vld [vmem:[#allocation5 + $0x4] sm:$0xf]
    %v45 = vld [vmem:[#allocation5 + $0x8] sm:$0xf]
    %v46 = vld [vmem:[#allocation5 + $0xc] sm:$0xf]
    %v49 = vunpack.c.l.b16 %v41
    %v50 = vunpack.c.l.b16 %v42
    %v51 = vpack.c.b16 %v50, %v49
    %v56 = vunpack.c.l.b16 %v43
    %v57 = vunpack.c.l.b16 %v44
    %v58 = vunpack.c.l.b16 %v45
    %v59 = vunpack.c.l.b16 %v46
    %v60 = vpack.c.b16 %v57, %v56
    %v61 = vpack.c.b16 %v59, %v58
    %vm64 = vcmask 261120
    %v66 = vsel %vm64, %v51, 0
    %68 = vmatprep.subr.bf16.mxu0 0
    %69 = vmatpush1.bf16.msra.mxu0 0
    %70 = vmatprep.subr.bf16.mxu0 0
    %71 = vmatpush1.bf16.msra.mxu0 0
    %72 = vmatprep.subr.bf16.mxu0 0
    %73 = vmatpush1.bf16.msra.mxu0 0
    %74 = vmatprep.subr.bf16.mxu0 0
    %75 = vmatpush1.bf16.msra.mxu0 0
    %76 = vmatprep.subr.bf16.mxu0 0
    %77 = vmatpush1.bf16.msra.mxu0 0
    %78 = vmatprep.subr.bf16.mxu0 0
    %79 = vmatpush1.bf16.msra.mxu0 0
    %80 = vmatprep.subr.bf16.mxu0 0
    %81 = vmatpush1.bf16.msra.mxu0 %v61
    %82 = vmatprep.subr.bf16.mxu0 0
    %83 = vmatpush1.bf16.msra.mxu0 %v60
    %84 = vmatprep.subr.bf16.mxu0 0
    %85 = vmatpush2.bf16.msra.mxu0 0
    %86 = vmatprep.subr.bf16.mxu0 0
    %87 = vmatpush2.bf16.msra.mxu0 0
    %88 = vmatprep.subr.bf16.mxu0 0
    %89 = vmatpush2.bf16.msra.mxu0 0
    %90 = vmatprep.subr.bf16.mxu0 0
    %91 = vmatpush2.bf16.msra.mxu0 0
    %92 = vmatprep.subr.bf16.mxu0 0
    %93 = vmatpush2.bf16.msra.mxu0 0
    %94 = vmatprep.subr.bf16.mxu0 0
    %95 = vmatpush2.bf16.msra.mxu0 0
    %96 = vmatprep.subr.bf16.mxu0 0
    %97 = vmatpush2.bf16.msra.mxu0 0
    %98 = vmatprep.subr.bf16.mxu0 0
    %99 = vmatpush2.bf16.msra.mxu0 0
    %100 = vmatprep.mubr.bf16.mxu0 0
    %101 = vmatmul.mubr.bf16.gmra.mxu0 %v66
    %v102 = vpop.f32.mrf.mxu0
    %v103 = vadd.f32 0.0, %v102
    %v104 = vpop.f32.mrf.mxu0
    %v105 = vpop.f32.mrf.mxu0
    %v106 = vadd.f32 0.0, %v105
    %v107 = vpop.f32.mrf.mxu0
    %108 = vdwg.mxu0
    %v109 = vpack.c.bf16 %v106, %v103
    %v111 = vunpack.c.l.b16 %v109
    %v112 = vunpack.c.h.b16 %v109
    %v113 = vpack.c.b16 %v111, %v111
    %v114 = vpack.c.b16 %v112, %v112
    %vm117 = vcmask 781312
    %118 = vst.msk [vmem:[#allocation7] sm:$0xf] %vm117, %v113
    %119 = vst.msk [vmem:[#allocation7 + $0x4] sm:$0xf] %vm117, %v114
    // Predicated region
    $region18: #{tpu_custom_call.1} parent=1 // pred_check
      _
    $region19: #{tpu_custom_call.1} parent=1 // pred_check_branch
      %121 = sbr.rel (0) target = $region21
    $region20: #{tpu_custom_call.1} parent=1 // pred_region
      %s123 = ssub.s32 128, 128
      %124 = vsyncadd [#allocation4], %s123
      %s125 = sshll.u32 [#allocation7], 4
      %s126 = int_to_ptr.vmem [resolvable:$true] %s125
      %131 = dma.vmem_to_hbm [thread:$0]  %s126, 128, %s2, [#allocation4], 64, 64, 4
    $region21: #{tpu_custom_call.1} parent=1 // pred_fallthru
      _
    // Predicated region
    $region22: #{tpu_custom_call.1} parent=1 // pred_check
      _
    $region23: #{tpu_custom_call.1} parent=1 // pred_check_branch
      %133 = sbr.rel (0) target = $region25
    $region24: #{tpu_custom_call.1} parent=1 // pred_region
      %134 = dma.done [#allocation4], 128
    $region25: #{tpu_custom_call.1} parent=1 // pred_fallthru
      _
    %135 = vsyncpa [#allocation3], 1
    %136 = vsyncpa [#allocation6], 1
    %137 = vsyncpa [#allocation4], 1

</llo_original>
